<compile_context>
chip_gen: v5e
topology: v5e:2x2
jax: 0.10.0
libtpu: 0.0.40
codegen_flags: <defaults>
</compile_context>

<pallas_src>
import numpy as np
import jax
import jax.numpy as jnp
from jax import lax
from jax.experimental import pallas as pl
from jax.experimental.pallas import tpu as pltpu

_EPS = 1e-5


# ---------------------------------------------------------------------------
# Kernel 1: bilinear upsample (align_corners=True, scale 2) + zero pad.
# One (H1, W1) -> (H2, W2) plane per grid step.
# ---------------------------------------------------------------------------
def _bilinear_pad_kernel(ah_ref, x_ref, awt_ref, o_ref):
    # ah_ref: (H2, H1)  x_ref: (1, 1, H1, W1)  awt_ref: (W1, W2)  o_ref: (1, 1, H2, W2)
    t = jnp.dot(ah_ref[...], x_ref[0, 0],
                precision=lax.Precision.HIGHEST,
                preferred_element_type=jnp.float32)            # (H2, W1)
    o_ref[0, 0] = jnp.dot(t, awt_ref[...],
                          precision=lax.Precision.HIGHEST,
                          preferred_element_type=jnp.float32)  # (H2, W2)


def _interp_matrix(n_in, n_up, n_target, pad_before):
    """Bilinear (align_corners=True) interpolation matrix with the F.pad border
    folded in as zero rows.  Shape: (n_target, n_in)."""
    A = np.zeros((n_target, n_in), dtype=np.float32)
    for j in range(n_up):
        r = pad_before + j
        if r < 0 or r >= n_target:
            continue
        if n_in == 1 or n_up == 1:
            A[r, 0] = 1.0
            continue
        src = j * (n_in - 1) / (n_up - 1)
        i0 = min(int(np.floor(src)), n_in - 1)
        i1 = min(i0 + 1, n_in - 1)
        frac = src - i0
        A[r, i0] += 1.0 - frac
        A[r, i1] += frac
    return A


# ---------------------------------------------------------------------------
# Kernel 2: fused depthwise-3x3 (pad=1, no bias) + pointwise-1x1 (no bias)
#           + BatchNorm(eval, folded into scale/shift) + ReLU.
# NHWC blocks, one image per grid step.  Depthwise = 9 shifted slices of a
# zero-padded VMEM scratch on the VPU; pointwise = lane-dense MXU matmul.
# ---------------------------------------------------------------------------
def _dsconv_bn_relu_kernel(x_ref, kdw_ref, wpw_ref, scale_ref, shift_ref,
                           o_ref, xp_ref):
    # x_ref: (1, H, W, Cin)   kdw_ref: (9, Cin)   wpw_ref: (Cin, Cout)
    # scale/shift: (1, Cout)  o_ref: (1, H*W, Cout)  xp_ref: (H+2, W+2, Cin)
    H = x_ref.shape[1]
    W = x_ref.shape[2]
    Cin = x_ref.shape[3]

    # Zero-padded copy of the tile (border stays zero => "same" padding).
    xp_ref[...] = jnp.zeros(xp_ref.shape, xp_ref.dtype)
    xp_ref[1:H + 1, 1:W + 1, :] = x_ref[0]

    # Depthwise 3x3: 9 shifted slices, per-channel tap broadcast along lanes.
    kdw = kdw_ref[...]                                   # (9, Cin)
    acc = jnp.zeros((H, W, Cin), jnp.float32)
    for t in range(9):
        dy, dx = t // 3, t % 3
        acc = acc + xp_ref[dy:dy + H, dx:dx + W, :] * kdw[t:t + 1, :]

    # Pointwise 1x1 on the MXU (lane-dense flattened rows) + BN affine + ReLU.
    pw = jnp.dot(acc.reshape(H * W, Cin), wpw_ref[...],
                 precision=lax.Precision.HIGHEST,
                 preferred_element_type=jnp.float32)     # (H*W, Cout)
    y = jnp.maximum(pw * scale_ref[...] + shift_ref[...], 0.0)
    o_ref[0] = y.astype(o_ref.dtype)


def _dsconv_bn_relu(x_nhwc, dw, pw, bn, eps=_EPS):
    """One depthwise_separable_conv + BatchNorm(eval) + ReLU stage (NHWC)."""
    B, H, W, Cin = x_nhwc.shape
    Cout = pw.shape[0]
    gamma, beta, mean, var = bn

    kdw = jnp.asarray(dw, jnp.float32).reshape(Cin, 9).T          # (9, Cin)
    wpw = jnp.asarray(pw, jnp.float32).T                          # (Cin, Cout)
    inv = gamma / jnp.sqrt(var + eps)
    scale = inv.reshape(1, Cout).astype(jnp.float32)
    shift = (beta - mean * inv).reshape(1, Cout).astype(jnp.float32)

    flops = 2 * B * H * W * Cin * (9 + Cout)
    bytes_accessed = 4 * (B * H * W * (Cin + Cout) + 9 * Cin + Cin * Cout + 4 * Cout)

    y = pl.pallas_call(
        _dsconv_bn_relu_kernel,
        out_shape=jax.ShapeDtypeStruct((B, H * W, Cout), jnp.float32),
        grid=(B,),
        in_specs=[
            pl.BlockSpec((1, H, W, Cin), lambda b: (b, 0, 0, 0)),
            pl.BlockSpec((9, Cin), lambda b: (0, 0)),
            pl.BlockSpec((Cin, Cout), lambda b: (0, 0)),
            pl.BlockSpec((1, Cout), lambda b: (0, 0)),
            pl.BlockSpec((1, Cout), lambda b: (0, 0)),
        ],
        out_specs=pl.BlockSpec((1, H * W, Cout), lambda b: (b, 0, 0)),
        scratch_shapes=[pltpu.VMEM((H + 2, W + 2, Cin), jnp.float32)],
        compiler_params=pltpu.CompilerParams(
            dimension_semantics=("parallel",),
            vmem_limit_bytes=32 * 1024 * 1024),
        cost_estimate=pl.CostEstimate(flops=flops, transcendentals=0,
                                      bytes_accessed=bytes_accessed),
    )(x_nhwc.astype(jnp.float32), kdw, wpw, scale, shift)
    # TODO(synk): for full-resolution UNet layers add a row-tile grid axis with a
    # 1-row halo so the per-step block stays inside scoped VMEM on v7x (64 MiB).
    return y.reshape(B, H, W, Cout)


def up_forward(x1, x2, dw1, pw1, bn1, dw2, pw2, bn2, eps=_EPS):
    """Forward pass of UNet `up(in_ch, out_ch, bilinear=True)` (inference BN)."""
    B, C1, H1, W1 = x1.shape
    _, C2, H2, W2 = x2.shape

    # 1) bilinear upsample (scale 2, align_corners=True) + F.pad, as two matmuls.
    diff_y, diff_x = H2 - 2 * H1, W2 - 2 * W1
    ah = jnp.asarray(_interp_matrix(H1, 2 * H1, H2, diff_y // 2))       # (H2, H1)
    awt = jnp.asarray(_interp_matrix(W1, 2 * W1, W2, diff_x // 2).T)    # (W1, W2)
    x1_up = pl.pallas_call(
        _bilinear_pad_kernel,
        out_shape=jax.ShapeDtypeStruct((B, C1, H2, W2), jnp.float32),
        grid=(B, C1),
        in_specs=[
            pl.BlockSpec((H2, H1), lambda b, c: (0, 0)),
            pl.BlockSpec((1, 1, H1, W1), lambda b, c: (b, c, 0, 0)),
            pl.BlockSpec((W1, W2), lambda b, c: (0, 0)),
        ],
        out_specs=pl.BlockSpec((1, 1, H2, W2), lambda b, c: (b, c, 0, 0)),
        compiler_params=pltpu.CompilerParams(
            dimension_semantics=("parallel", "parallel"),
            vmem_limit_bytes=32 * 1024 * 1024),
        cost_estimate=pl.CostEstimate(
            flops=2 * B * C1 * (H2 * H1 * W1 + H2 * W1 * W2),
            transcendentals=0,
            bytes_accessed=4 * (B * C1 * (H1 * W1 + H2 * W2) + H2 * H1 + W1 * W2)),
    )(ah, x1.astype(jnp.float32), awt)

    # 2) channel concat + NCHW -> NHWC (pure data movement, left to XLA).
    x = jnp.concatenate([x2.astype(jnp.float32), x1_up], axis=1)
    x = jnp.transpose(x, (0, 2, 3, 1))                                  # (B, H2, W2, in_ch)

    # 3) double_conv: two fused dw+pw+BN+ReLU stages (intermediate stays NHWC).
    y = _dsconv_bn_relu(x, dw1, pw1, bn1, eps)
    y = _dsconv_bn_relu(y, dw2, pw2, bn2, eps)
    return jnp.transpose(y, (0, 3, 1, 2))                               # back to NCHW


# ---------------------------------------------------------------------------
# Pure-JAX reference (gather-based bilinear + lax.conv), NCHW throughout.
# ---------------------------------------------------------------------------
def _reference_up(x1, x2, dw1, pw1, bn1, dw2, pw2, bn2, eps=_EPS):
    B, C1, H1, W1 = x1.shape
    H2, W2 = x2.shape[2], x2.shape[3]
    Hu, Wu = 2 * H1, 2 * W1

    def up_bilinear(x):
        b, c, hin, win = x.shape
        hout, wout = 2 * hin, 2 * win

        def src(n_in, n_out):
            if n_in == 1 or n_out == 1:
                return jnp.zeros((n_out,), jnp.float32)
            return jnp.arange(n_out, dtype=jnp.float32) * ((n_in - 1) / (n_out - 1))

        sy, sx = src(hin, hout), src(win, wout)
        y0 = jnp.clip(jnp.floor(sy).astype(jnp.int32), 0, hin - 1)
        x0 = jnp.clip(jnp.floor(sx).astype(jnp.int32), 0, win - 1)
        y1 = jnp.minimum(y0 + 1, hin - 1)
        x1i = jnp.minimum(x0 + 1, win - 1)
        wy = (sy - y0.astype(jnp.float32))[None, None, :, None]
        wx = (sx - x0.astype(jnp.float32))[None, None, None, :]
        rows = x[:, :, y0, :] * (1.0 - wy) + x[:, :, y1, :] * wy
        return rows[:, :, :, x0] * (1.0 - wx) + rows[:, :, :, x1i] * wx

    x1u = up_bilinear(x1)
    dy, dx = H2 - Hu, W2 - Wu
    x1p = jnp.pad(x1u, ((0, 0), (0, 0), (dy // 2, dy - dy // 2), (dx // 2, dx - dx // 2)))
    x = jnp.concatenate([x2, x1p], axis=1)

    def stage(x, dw, pw, bn):
        gamma, beta, mean, var = bn
        cin, cout = x.shape[1], pw.shape[0]
        y = lax.conv_general_dilated(
            x, dw.reshape(cin, 1, 3, 3), (1, 1), ((1, 1), (1, 1)),
            feature_group_count=cin,
            dimension_numbers=("NCHW", "OIHW", "NCHW"),
            precision=lax.Precision.HIGHEST)
        y = lax.conv_general_dilated(
            y, pw.reshape(cout, cin, 1, 1), (1, 1), ((0, 0), (0, 0)),
            dimension_numbers=("NCHW", "OIHW", "NCHW"),
            precision=lax.Precision.HIGHEST)
        y = ((y - mean[None, :, None, None]) / jnp.sqrt(var[None, :, None, None] + eps)
             * gamma[None, :, None, None] + beta[None, :, None, None])
        return jnp.maximum(y, 0.0)

    y = stage(x, dw1, pw1, bn1)
    return stage(y, dw2, pw2, bn2)


if __name__ == "__main__":
    B = 2
    C_low = 4                 # channels of x1 (decoder feature, = in_ch // 2)
    C_skip = 4                # channels of x2 (skip connection)
    in_ch = C_low + C_skip    # = 8
    out_ch = 4
    H1 = W1 = 8
    H2 = W2 = 16

    key = jax.random.PRNGKey(0)
    ks = jax.random.split(key, 16)
    x1 = jax.random.normal(ks[0], (B, C_low, H1, W1), dtype=jnp.float32)
    x2 = jax.random.normal(ks[1], (B, C_skip, H2, W2), dtype=jnp.float32)

    # stage 1: depthwise (in_ch,3,3), pointwise (out_ch,in_ch), BN(out_ch)
    dw1 = 0.2 * jax.random.normal(ks[2], (in_ch, 3, 3), dtype=jnp.float32)
    pw1 = 0.2 * jax.random.normal(ks[3], (out_ch, in_ch), dtype=jnp.float32)
    g1 = jax.random.uniform(ks[4], (out_ch,), minval=0.5, maxval=1.5, dtype=jnp.float32)
    b1 = 0.1 * jax.random.normal(ks[5], (out_ch,), dtype=jnp.float32)
    m1 = 0.1 * jax.random.normal(ks[6], (out_ch,), dtype=jnp.float32)
    v1 = jax.random.uniform(ks[7], (out_ch,), minval=0.5, maxval=1.5, dtype=jnp.float32)

    # stage 2: depthwise (out_ch,3,3), pointwise (out_ch,out_ch), BN(out_ch)
    dw2 = 0.2 * jax.random.normal(ks[8], (out_ch, 3, 3), dtype=jnp.float32)
    pw2 = 0.2 * jax.random.normal(ks[9], (out_ch, out_ch), dtype=jnp.float32)
    g2 = jax.random.uniform(ks[10], (out_ch,), minval=0.5, maxval=1.5, dtype=jnp.float32)
    b2 = 0.1 * jax.random.normal(ks[11], (out_ch,), dtype=jnp.float32)
    m2 = 0.1 * jax.random.normal(ks[12], (out_ch,), dtype=jnp.float32)
    v2 = jax.random.uniform(ks[13], (out_ch,), minval=0.5, maxval=1.5, dtype=jnp.float32)

    bn1 = (g1, b1, m1, v1)
    bn2 = (g2, b2, m2, v2)

    y = up_forward(x1, x2, dw1, pw1, bn1, dw2, pw2, bn2)
    y = jax.block_until_ready(y)

    y_ref = _reference_up(x1, x2, dw1, pw1, bn1, dw2, pw2, bn2)
    assert y.shape == (B, out_ch, H2, W2), y.shape
    max_err = float(jnp.max(jnp.abs(y - y_ref)))
    assert jnp.allclose(y, y_ref, atol=5e-3, rtol=5e-3), f"mismatch, max_err={max_err}"

    print("KERNEL_OK")
</pallas_src>

<mosaic_0001>
module attributes {stable_mosaic.version = 11 : i64} {
  func.func @_bilinear_pad_kernel(%arg0: i32, %arg1: i32, %arg2: memref<16x8xf32, #tpu.memory_space<vmem>>, %arg3: memref<1x1x8x8xf32, #tpu.memory_space<vmem>>, %arg4: memref<8x16xf32, #tpu.memory_space<vmem>>, %arg5: memref<1x1x16x16xf32, #tpu.memory_space<vmem>>) attributes {dimension_semantics = [#tpu.dimension_semantics<parallel>, #tpu.dimension_semantics<parallel>], iteration_bounds = array<i64: 2, 4>, scalar_prefetch = 0 : i64, scratch_operands = 0 : i64, tpu.core_type = #tpu.core_type<tc>, window_params = [{pipeline_mode = #tpu.pipeline_mode<synchronous>, transform_indices = @transform_0, window_bounds = array<i64: 16, 8>}, {transform_indices = @transform_1, window_bounds = array<i64: 1, 1, 8, 8>}, {pipeline_mode = #tpu.pipeline_mode<synchronous>, transform_indices = @transform_2, window_bounds = array<i64: 8, 16>}, {transform_indices = @transform_3, window_bounds = array<i64: 1, 1, 16, 16>}]} {
    %c0 = arith.constant 0 : index
    %c0_0 = arith.constant 0 : index
    %0 = vector.load %arg2[%c0, %c0_0] : memref<16x8xf32, #tpu.memory_space<vmem>>, vector<16x8xf32>
    %c0_1 = arith.constant 0 : index
    %c0_2 = arith.constant 0 : index
    %c0_3 = arith.constant 0 : index
    %c0_4 = arith.constant 0 : index
    %1 = vector.load %arg3[%c0_1, %c0_2, %c0_3, %c0_4] : memref<1x1x8x8xf32, #tpu.memory_space<vmem>>, vector<1x1x8x8xf32>
    %2 = vector.shape_cast %1 : vector<1x1x8x8xf32> to vector<8x8xf32>
    %cst = arith.constant dense<0.000000e+00> : vector<16x8xf32>
    %3 = tpu.matmul %0, %2, %cst {dimension_numbers = #tpu.dot_dimension_numbers<[1], [0], [0], [1], [0, 0, 1, 1], [], []>, precision = #tpu.contract_precision<fp32>} : vector<16x8xf32>, vector<8x8xf32>, vector<16x8xf32> -> vector<16x8xf32>
    %c0_5 = arith.constant 0 : index
    %c0_6 = arith.constant 0 : index
    %4 = vector.load %arg4[%c0_5, %c0_6] : memref<8x16xf32, #tpu.memory_space<vmem>>, vector<8x16xf32>
    %cst_7 = arith.constant dense<0.000000e+00> : vector<16x16xf32>
    %5 = tpu.matmul %3, %4, %cst_7 {dimension_numbers = #tpu.dot_dimension_numbers<[1], [0], [0], [1], [0, 0, 1, 1], [], []>, precision = #tpu.contract_precision<fp32>} : vector<16x8xf32>, vector<8x16xf32>, vector<16x16xf32> -> vector<16x16xf32>
    %c0_8 = arith.constant 0 : index
    %c0_9 = arith.constant 0 : index
    %c0_10 = arith.constant 0 : index
    %c0_11 = arith.constant 0 : index
    %6 = vector.load %arg5[%c0_8, %c0_9, %c0_10, %c0_11] : memref<1x1x16x16xf32, #tpu.memory_space<vmem>>, vector<1x1x16x16xf32>
    %7 = vector.shape_cast %6 : vector<1x1x16x16xf32> to vector<16x16xf32>
    %8 = vector.shape_cast %5 : vector<16x16xf32> to vector<1x1x16x16xf32>
    tpu.vector_store %arg5[%c0_8, %c0_9, %c0_10, %c0_11], %8 {strides = array<i32>} : memref<1x1x16x16xf32, #tpu.memory_space<vmem>>, vector<1x1x16x16xf32>,
    return
  }
  func.func @transform_0(%arg0: i32, %arg1: i32) -> (i32, i32) {
    %c0_i32 = arith.constant 0 : i32
    %c0_i32_0 = arith.constant 0 : i32
    %c0_i32_1 = arith.constant 0 : i32
    return %c0_i32, %c0_i32_0 : i32, i32
  }
  func.func @transform_1(%arg0: i32, %arg1: i32) -> (i32, i32, i32, i32) {
    %c0_i32 = arith.constant 0 : i32
    %c0_i32_0 = arith.constant 0 : i32
    %c0_i32_1 = arith.constant 0 : i32
    return %arg0, %arg1, %c0_i32, %c0_i32_0 : i32, i32, i32, i32
  }
  func.func @transform_2(%arg0: i32, %arg1: i32) -> (i32, i32) {
    %c0_i32 = arith.constant 0 : i32
    %c0_i32_0 = arith.constant 0 : i32
    %c0_i32_1 = arith.constant 0 : i32
    return %c0_i32, %c0_i32_0 : i32, i32
  }
  func.func @transform_3(%arg0: i32, %arg1: i32) -> (i32, i32, i32, i32) {
    %c0_i32 = arith.constant 0 : i32
    %c0_i32_0 = arith.constant 0 : i32
    %c0_i32_1 = arith.constant 0 : i32
    return %arg0, %arg1, %c0_i32, %c0_i32_0 : i32, i32, i32, i32
  }
}

</mosaic_0001>

<llo_original>
// kernel: tpu_custom_call.1
$region0: #{tpu_custom_call.1}
  #allocation0 [shape = 'u32[]', space=smem, size = 0x4, offset = 0x4, fixed_abs, tag = 'smem constant byte address 0x4 - core index']
  #allocation1 [shape = 'u32[72,128]{1,0:T(1,128)}', space=vmem, size = 0x9000, scoped, tag = 'internal scratch']
  %s0 = inlined_call_operand.vmem [shape: f32[16,8], index: 0, kind: input, shape index: {}]
  %s1 = inlined_call_operand.hbm [shape: f32[2,4,8,8], index: 1, kind: input, shape index: {}]
  %s2 = inlined_call_operand.vmem [shape: f32[8,16], index: 2, kind: input, shape index: {}]
  %s3 = inlined_call_operand.hbm [shape: f32[2,4,16,16], index: 3, kind: output, shape index: {}]
  %s4 = sld [smem:[#allocation0]]
  $region49: #{tpu_custom_call.1} parent=0
    _
  %s6 = ssub.s32 1, %s4
  %s7 = scalar_select 0, %s6, %s4
  $region1: #{tpu_custom_call.1} parent=0
    #allocation2 [shape = 'u8[8192]{0}', space=vmem, size = 0x2000, scoped, tag = 'input window, operand 1']
    #allocation3 [shape = 's32[2]{0}', space=sflag, size = 0x8, scoped, tag = 'scoped memory for tpu_custom_call.1']
    #allocation4 [shape = 's32[2]{0}', space=sflag, size = 0x8, scoped, tag = 'scoped memory for tpu_custom_call.1']
    #allocation5 [shape = 'u8[16384]{0}', space=vmem, size = 0x4000, scoped, tag = 'output window, operand 0']
    %8 = vsyncpa [#allocation3], 0
    %s9 = scalar_lea.sflag [#allocation3], 1
    %10 = vsyncpa %s9, 0
    %11 = vsyncpa [#allocation4], 0
    %s12 = scalar_lea.sflag [#allocation4], 1
    %13 = vsyncpa %s12, 0
    loop: start=0, step=1, limit=10
    $region2: #{tpu_custom_call.1} parent=1 // loop_pre_header
      _
    $region3: #{tpu_custom_call.1} parent=1 // loop_header
      %s15 = sphi 0, %s19
      %p16 = scmp.ge.s32.totalorder %s15, 10
      %s22 = sphi 0, %s34
      %s23 = sphi 0, %s30
      %s24 = sphi 0, %s22
      %s25 = sphi 0, %s23
      %s26 = sphi 0, %s24
      %s27 = sphi 0, %s25
      %s35 = sphi 0, %s35
      %s37 = sphi 0, %s35
      %s38 = sphi 0, %s37
      %s52 = sphi 0, %s38
      %s60 = sphi 0, %s62
      %s63 = sphi 0, %s60
      %s64 = sphi 0, %s63
      %s80 = sphi 0, %s64
      %s84 = sphi 0, %s84
      %s86 = sphi 0, %s84
      %s87 = sphi 0, %s86
      %s101 = sphi 0, %s87
      %s109 = sphi 0, %s111
      %s112 = sphi 0, %s109
      %s113 = sphi 0, %s112
      %s129 = sphi 0, %s113
    $region4: #{tpu_custom_call.1} parent=1 // loop_header_branch
      %18 = sbr.rel (%p16) target = $region8
    $region5: #{tpu_custom_call.1} parent=1 // loop_body
      %s20 = ssub.s32 %s15, 1
      %s21 = ssub.s32 %s15, 2
      %s28 = sadd.s32 1, %s23
      %p29 = scmp.ge.s32.totalorder %s28, 4
      %s30 = scalar_select %p29, 0, %s28
      %s31 = sadd.s32 1, %s22
      %s32 = scalar_select %p29, %s31, %s22
      %p33 = scmp.ge.s32.totalorder %s32, 2
      %s34 = scalar_select %p33, 0, %s32
      %s36 = sadd.s32 %s35, 1
      %p39 = scmp.eq.s32.totalorder %s15, 7
      %p40 = scmp.ne.s32.totalorder %s35, %s37
      %p41 = scmp.eq.s32.totalorder %s15, 0
      %p42 = por %p40, %p41
      %p43 = scmp.ne.s32.totalorder %s35, %s37
      %p44 = scmp.eq.s32.totalorder %s20, 7
      %p45 = por %p43, %p44
      %p46 = scmp.ne.s32.totalorder %s37, %s38
      %p47 = scmp.eq.s32.totalorder %s20, 0
      %p48 = por %p46, %p47
      %p49 = scmp.ne.s32.totalorder %s37, %s38
      %p50 = scmp.eq.s32.totalorder %s21, 7
      %p51 = por %p49, %p50
      %p53 = scmp.ne.s32.totalorder %s38, %s52
      %p54 = scmp.eq.s32.totalorder %s21, 0
      %p55 = por %p53, %p54
      %s56 = ssub.s32 %s22, %s34
      %s57 = ssub.s32 %s23, %s30
      %s58 = sor.u32 %s56, %s57
      %p59 = scmp.eq.s32.totalorder %s58, 0
      %s61 = sadd.s32 %s60, 1
      %s62 = scalar_select %p59, %s60, %s61
      %p65 = pneg %p59
      %p66 = scmp.eq.s32.totalorder %s15, 7
      %p67 = por %p65, %p66
      %p68 = scmp.ne.s32.totalorder %s60, %s63
      %p69 = scmp.eq.s32.totalorder %s15, 0
      %p70 = por %p68, %p69
      %p71 = scmp.ne.s32.totalorder %s60, %s63
      %p72 = scmp.eq.s32.totalorder %s20, 7
      %p73 = por %p71, %p72
      %p74 = scmp.ne.s32.totalorder %s63, %s64
      %p75 = scmp.eq.s32.totalorder %s20, 0
      %p76 = por %p74, %p75
      %p77 = scmp.ne.s32.totalorder %s63, %s64
      %p78 = scmp.eq.s32.totalorder %s21, 7
      %p79 = por %p77, %p78
      %p81 = scmp.ne.s32.totalorder %s64, %s80
      %p82 = scmp.eq.s32.totalorder %s21, 0
      %p83 = por %p81, %p82
      %s85 = sadd.s32 %s84, 1
      %p88 = scmp.eq.s32.totalorder %s15, 7
      %p89 = scmp.ne.s32.totalorder %s84, %s86
      %p90 = scmp.eq.s32.totalorder %s15, 0
      %p91 = por %p89, %p90
      %p92 = scmp.ne.s32.totalorder %s84, %s86
      %p93 = scmp.eq.s32.totalorder %s20, 7
      %p94 = por %p92, %p93
      %p95 = scmp.ne.s32.totalorder %s86, %s87
      %p96 = scmp.eq.s32.totalorder %s20, 0
      %p97 = por %p95, %p96
      %p98 = scmp.ne.s32.totalorder %s86, %s87
      %p99 = scmp.eq.s32.totalorder %s21, 7
      %p100 = por %p98, %p99
      %p102 = scmp.ne.s32.totalorder %s87, %s101
      %p103 = scmp.eq.s32.totalorder %s21, 0
      %p104 = por %p102, %p103
      %s105 = ssub.s32 %s22, %s34
      %s106 = ssub.s32 %s23, %s30
      %s107 = sor.u32 %s105, %s106
      %p108 = scmp.eq.s32.totalorder %s107, 0
      %s110 = sadd.s32 %s109, 1
      %s111 = scalar_select %p108, %s109, %s110
      %p114 = pneg %p108
      %p115 = scmp.eq.s32.totalorder %s15, 7
      %p116 = por %p114, %p115
      %p117 = scmp.ne.s32.totalorder %s109, %s112
      %p118 = scmp.eq.s32.totalorder %s15, 0
      %p119 = por %p117, %p118
      %p120 = scmp.ne.s32.totalorder %s109, %s112
      %p121 = scmp.eq.s32.totalorder %s20, 7
      %p122 = por %p120, %p121
      %p123 = scmp.ne.s32.totalorder %s112, %s113
      %p124 = scmp.eq.s32.totalorder %s20, 0
      %p125 = por %p123, %p124
      %p126 = scmp.ne.s32.totalorder %s112, %s113
      %p127 = scmp.eq.s32.totalorder %s21, 7
      %p128 = por %p126, %p127
      %p130 = scmp.ne.s32.totalorder %s113, %s129
      %p131 = scmp.eq.s32.totalorder %s21, 0
      %p132 = por %p130, %p131
      %p133 = scmp.le.s32.totalorder 1, %s15
      %p134 = scmp.lt.s32.totalorder %s15, 9
      %p135 = pnand %p133, %p134
      %p136 = pneg %p135
      // Predicated region
      $region9: #{tpu_custom_call.1} parent=5 // pred_check
        _
      $region10: #{tpu_custom_call.1} parent=5 // pred_check_branch
        %138 = sbr.rel (%p135) target = $region12
      $region11: #{tpu_custom_call.1} parent=5 // pred_region
        %s139 = ssub.s32 %s15, 1
        // Predicated region
        $region13: #{tpu_custom_call.1} parent=11 // pred_check
          %p140 = pneg %p48
        $region14: #{tpu_custom_call.1} parent=11 // pred_check_branch
          %142 = sbr.rel (%p140) target = $region16
        $region15: #{tpu_custom_call.1} parent=11 // pred_region
          _
        $region16: #{tpu_custom_call.1} parent=11 // pred_fallthru
          _
        // Predicated region
        $region17: #{tpu_custom_call.1} parent=11 // pred_check
          %p143 = pneg %p97
        $region18: #{tpu_custom_call.1} parent=11 // pred_check_branch
          %145 = sbr.rel (%p143) target = $region20
        $region19: #{tpu_custom_call.1} parent=11 // pred_region
          _
        $region20: #{tpu_custom_call.1} parent=11 // pred_fallthru
          _
      $region12: #{tpu_custom_call.1} parent=5 // pred_fallthru
        _
      %p146 = scmp.lt.s32.totalorder %s15, 8
      // Predicated region
      $region21: #{tpu_custom_call.1} parent=5 // pred_check
        %p147 = pneg %p146
      $region22: #{tpu_custom_call.1} parent=5 // pred_check_branch
        %149 = sbr.rel (%p147) target = $region24
      $region23: #{tpu_custom_call.1} parent=5 // pred_region
        // Predicated region
        $region25: #{tpu_custom_call.1} parent=23 // pred_check
          %p150 = pneg %p70
        $region26: #{tpu_custom_call.1} parent=23 // pred_check_branch
          %152 = sbr.rel (%p150) target = $region28
        $region27: #{tpu_custom_call.1} parent=23 // pred_region
          %s153 = sand.u32 %s60, 1
          %s154 = scalar_lea.sflag [#allocation3], %s153
          %s155 = sand.u32 %s60, 1
          %s156 = smul.addr %s155, 8
          %s157 = scalar_lea.vmem [#allocation2], %s156
          %159 = vsyncadd %s154, 0
          %s160 = smul.addr %s22, 4
          %s161 = sadd.s32 %s23, %s160
          %s162 = smul.addr %s161, 8
          %s163 = scalar_lea.hbm %s1, %s162
          %s165 = sshll.u32 %s163, 4
          %s166 = int_to_ptr.hbm [resolvable:$true] %s165
          %s167 = sshll.u32 %s157, 4
          %s168 = int_to_ptr.vmem [resolvable:$true] %s167
          %170 = dma.hbm_to_vmem [thread:$0]  %s166, 128, %s168, %s154
        $region28: #{tpu_custom_call.1} parent=23 // pred_fallthru
          _
      $region24: #{tpu_custom_call.1} parent=5 // pred_fallthru
        _
      %p171 = scmp.le.s32.totalorder 1, %s15
      %p172 = scmp.lt.s32.totalorder %s15, 9
      %p173 = pnand %p171, %p172
      %p174 = pneg %p173
      // Predicated region
      $region29: #{tpu_custom_call.1} parent=5 // pred_check
        _
      $region30: #{tpu_custom_call.1} parent=5 // pred_check_branch
        %176 = sbr.rel (%p173) target = $region32
      $region31: #{tpu_custom_call.1} parent=5 // pred_region
        %s177 = ssub.s32 %s15, 1
        %s178 = sand.u32 %s63, 1
        %s179 = scalar_lea.sflag [#allocation3], %s178
        %s180 = sand.u32 %s63, 1
        %s181 = smul.addr %s180, 8
        %s182 = scalar_lea.vmem [#allocation2], %s181
        // Predicated region
        $region33: #{tpu_custom_call.1} parent=31 // pred_check
          %p183 = pneg %p76
        $region34: #{tpu_custom_call.1} parent=31 // pred_check_branch
          %185 = sbr.rel (%p183) target = $region36
        $region35: #{tpu_custom_call.1} parent=31 // pred_region
          %187 = dma.done %s179, 128
        $region36: #{tpu_custom_call.1} parent=31 // pred_fallthru
          _
        %p188 = pneg %p48
        %p189 = pneg %p45
        %s190 = sand.u32 %s63, 1
        %s191 = scalar_lea.sflag [#allocation3], %s190
        %s192 = sand.u32 %s63, 1
        %s193 = smul.addr %s192, 8
        %s194 = scalar_lea.vmem [#allocation2], %s193
        %p195 = pneg %p76
        %p196 = pneg %p73
        %p197 = pneg %p97
        %p198 = pneg %p94
        %p199 = pneg %p125
        %p200 = pneg %p122
        %s201 = sand.u32 %s112, 1
        %s202 = scalar_lea.sflag [#allocation4], %s201
        %s203 = sand.u32 %s112, 1
        %s204 = smul.addr %s203, 16
        %s205 = scalar_lea.vmem [#allocation5], %s204
        %v206 = vld [vmem:[%s0] sm:$0xff]
        %v207 = vld [vmem:[%s0 + $0x8] sm:$0xff]
        %v208 = vld [vmem:[%s182] sm:$0xff]
        %vm209 = vcmask 64512
        %v211 = vsel %vm209, %v206, 0
        %v214 = vsel %vm209, %v207, 0
        %216 = vmatpush.msra.mxu0 0.0
        %217 = vmatpush.msra.mxu0 0.0
        %218 = vmatpush.msra.mxu0 0.0
        %219 = vmatpush.msra.mxu0 0.0
        %220 = vmatpush.msra.mxu0 0.0
        %221 = vmatpush.msra.mxu0 0.0
        %222 = vmatpush.msra.mxu0 0.0
        %223 = vmatpush.msra.mxu0 0.0
        %224 = vmatpush.msra.mxu0 0.0
        %225 = vmatpush.msra.mxu0 0.0
        %226 = vmatpush.msra.mxu0 0.0
        %227 = vmatpush.msra.mxu0 0.0
        %228 = vmatpush.msra.mxu0 0.0
        %229 = vmatpush.msra.mxu0 0.0
        %230 = vmatpush.msra.mxu0 0.0
        %v231 = vand.u32 %v208, 4294901760
        %232 = vmatpush.msra.mxu0 %v231
        %v233 = vand.u32 %v211, 4294901760
        %v234 = vsub.f32 %v211, %v233
        %v235 = vand.u32 %v234, 4294901760
        %v236 = vsub.f32 %v234, %v235
        %v237 = vand.u32 %v236, 4294901760
        %238 = vmatmul.f32.gmra.mxu0 %v237
        %v239 = vpop.f32.mrf.mxu0
        %v240 = vadd.f32 0.0, %v239
        %v241 = vand.u32 %v214, 4294901760
        %v242 = vsub.f32 %v214, %v241
        %v243 = vand.u32 %v242, 4294901760
        %v244 = vsub.f32 %v242, %v243
        %v245 = vand.u32 %v244, 4294901760
        %246 = vmatmul.f32.gmra.mxu0 %v245
        %v247 = vpop.f32.mrf.mxu0
        %v248 = vadd.f32 0.0, %v247
        %249 = vdwg.mxu0
        %250 = vmatpush.msra.mxu0 0.0
        %251 = vmatpush.msra.mxu0 0.0
        %252 = vmatpush.msra.mxu0 0.0
        %253 = vmatpush.msra.mxu0 0.0
        %254 = vmatpush.msra.mxu0 0.0
        %255 = vmatpush.msra.mxu0 0.0
        %256 = vmatpush.msra.mxu0 0.0
        %257 = vmatpush.msra.mxu0 0.0
        %258 = vmatpush.msra.mxu0 0.0
        %259 = vmatpush.msra.mxu0 0.0
        %260 = vmatpush.msra.mxu0 0.0
        %261 = vmatpush.msra.mxu0 0.0
        %262 = vmatpush.msra.mxu0 0.0
        %263 = vmatpush.msra.mxu0 0.0
        %264 = vmatpush.msra.mxu0 0.0
        %v265 = vand.u32 %v208, 4294901760
        %v266 = vsub.f32 %v208, %v265
        %v267 = vand.u32 %v266, 4294901760
        %v268 = vsub.f32 %v266, %v267
        %v269 = vand.u32 %v268, 4294901760
        %270 = vmatpush.msra.mxu0 %v269
        %v271 = vand.u32 %v211, 4294901760
        %272 = vmatmul.f32.gmra.mxu0 %v271
        %v273 = vpop.f32.mrf.mxu0
        %v274 = vadd.f32 %v240, %v273
        %v275 = vand.u32 %v214, 4294901760
        %276 = vmatmul.f32.gmra.mxu0 %v275
        %v277 = vpop.f32.mrf.mxu0
        %v278 = vadd.f32 %v248, %v277
        %279 = vdwg.mxu0
        %280 = vmatpush.msra.mxu0 0.0
        %281 = vmatpush.msra.mxu0 0.0
        %282 = vmatpush.msra.mxu0 0.0
        %283 = vmatpush.msra.mxu0 0.0
        %284 = vmatpush.msra.mxu0 0.0
        %285 = vmatpush.msra.mxu0 0.0
        %286 = vmatpush.msra.mxu0 0.0
        %287 = vmatpush.msra.mxu0 0.0
        %288 = vmatpush.msra.mxu0 0.0
        %289 = vmatpush.msra.mxu0 0.0
        %290 = vmatpush.msra.mxu0 0.0
        %291 = vmatpush.msra.mxu0 0.0
        %292 = vmatpush.msra.mxu0 0.0
        %293 = vmatpush.msra.mxu0 0.0
        %294 = vmatpush.msra.mxu0 0.0
        %v295 = vand.u32 %v208, 4294901760
        %v296 = vsub.f32 %v208, %v295
        %297 = vmatpush.msra.mxu0 %v296
        %v298 = vand.u32 %v211, 4294901760
        %v299 = vsub.f32 %v211, %v298
        %300 = vmatmul.f32.gmra.mxu0 %v299
        %v301 = vpop.f32.mrf.mxu0
        %v302 = vadd.f32 %v274, %v301
        %v303 = vand.u32 %v214, 4294901760
        %v304 = vsub.f32 %v214, %v303
        %305 = vmatmul.f32.gmra.mxu0 %v304
        %v306 = vpop.f32.mrf.mxu0
        %v307 = vadd.f32 %v278, %v306
        %308 = vdwg.mxu0
        %309 = vmatpush.msra.mxu0 0.0
        %310 = vmatpush.msra.mxu0 0.0
        %311 = vmatpush.msra.mxu0 0.0
        %312 = vmatpush.msra.mxu0 0.0
        %313 = vmatpush.msra.mxu0 0.0
        %314 = vmatpush.msra.mxu0 0.0
        %315 = vmatpush.msra.mxu0 0.0
        %316 = vmatpush.msra.mxu0 0.0
        %317 = vmatpush.msra.mxu0 0.0
        %318 = vmatpush.msra.mxu0 0.0
        %319 = vmatpush.msra.mxu0 0.0
        %320 = vmatpush.msra.mxu0 0.0
        %321 = vmatpush.msra.mxu0 0.0
        %322 = vmatpush.msra.mxu0 0.0
        %323 = vmatpush.msra.mxu0 0.0
        %v324 = vand.u32 %v208, 4294901760
        %325 = vmatpush.msra.mxu0 %v324
        %v326 = vand.u32 %v211, 4294901760
        %v327 = vsub.f32 %v211, %v326
        %v328 = vand.u32 %v327, 4294901760
        %329 = vmatmul.f32.gmra.mxu0 %v328
        %v330 = vpop.f32.mrf.mxu0
        %v331 = vadd.f32 %v302, %v330
        %v332 = vand.u32 %v214, 4294901760
        %v333 = vsub.f32 %v214, %v332
        %v334 = vand.u32 %v333, 4294901760
        %335 = vmatmul.f32.gmra.mxu0 %v334
        %v336 = vpop.f32.mrf.mxu0
        %v337 = vadd.f32 %v307, %v336
        %338 = vdwg.mxu0
        %339 = vmatpush.msra.mxu0 0.0
        %340 = vmatpush.msra.mxu0 0.0
        %341 = vmatpush.msra.mxu0 0.0
        %342 = vmatpush.msra.mxu0 0.0
        %343 = vmatpush.msra.mxu0 0.0
        %344 = vmatpush.msra.mxu0 0.0
        %345 = vmatpush.msra.mxu0 0.0
        %346 = vmatpush.msra.mxu0 0.0
        %347 = vmatpush.msra.mxu0 0.0
        %348 = vmatpush.msra.mxu0 0.0
        %349 = vmatpush.msra.mxu0 0.0
        %350 = vmatpush.msra.mxu0 0.0
        %351 = vmatpush.msra.mxu0 0.0
        %352 = vmatpush.msra.mxu0 0.0
        %353 = vmatpush.msra.mxu0 0.0
        %v354 = vand.u32 %v208, 4294901760
        %v355 = vsub.f32 %v208, %v354
        %v356 = vand.u32 %v355, 4294901760
        %357 = vmatpush.msra.mxu0 %v356
        %v358 = vand.u32 %v211, 4294901760
        %359 = vmatmul.f32.gmra.mxu0 %v358
        %v360 = vpop.f32.mrf.mxu0
        %v361 = vadd.f32 %v331, %v360
        %v362 = vand.u32 %v214, 4294901760
        %363 = vmatmul.f32.gmra.mxu0 %v362
        %v364 = vpop.f32.mrf.mxu0
        %v365 = vadd.f32 %v337, %v364
        %366 = vdwg.mxu0
        %367 = vmatpush.msra.mxu0 0.0
        %368 = vmatpush.msra.mxu0 0.0
        %369 = vmatpush.msra.mxu0 0.0
        %370 = vmatpush.msra.mxu0 0.0
        %371 = vmatpush.msra.mxu0 0.0
        %372 = vmatpush.msra.mxu0 0.0
        %373 = vmatpush.msra.mxu0 0.0
        %374 = vmatpush.msra.mxu0 0.0
        %375 = vmatpush.msra.mxu0 0.0
        %376 = vmatpush.msra.mxu0 0.0
        %377 = vmatpush.msra.mxu0 0.0
        %378 = vmatpush.msra.mxu0 0.0
        %379 = vmatpush.msra.mxu0 0.0
        %380 = vmatpush.msra.mxu0 0.0
        %381 = vmatpush.msra.mxu0 0.0
        %v382 = vand.u32 %v208, 4294901760
        %383 = vmatpush.msra.mxu0 %v382
        %v384 = vand.u32 %v211, 4294901760
        %385 = vmatmul.f32.gmra.mxu0 %v384
        %v386 = vpop.f32.mrf.mxu0
        %v387 = vadd.f32 %v361, %v386
        %v388 = vand.u32 %v214, 4294901760
        %389 = vmatmul.f32.gmra.mxu0 %v388
        %v390 = vpop.f32.mrf.mxu0
        %v391 = vadd.f32 %v365, %v390
        %392 = vdwg.mxu0
        %v393 = vld [vmem:[%s2] sm:$0xff]
        %v395 = vsel %vm209, %v387, 0
        %v398 = vsel %vm209, %v391, 0
        %400 = vmatpush.msra.mxu0 0.0
        %401 = vmatpush.msra.mxu0 0.0
        %402 = vmatpush.msra.mxu0 0.0
        %403 = vmatpush.msra.mxu0 0.0
        %404 = vmatpush.msra.mxu0 0.0
        %405 = vmatpush.msra.mxu0 0.0
        %406 = vmatpush.msra.mxu0 0.0
        %407 = vmatpush.msra.mxu0 0.0
        %408 = vmatpush.msra.mxu0 0.0
        %409 = vmatpush.msra.mxu0 0.0
        %410 = vmatpush.msra.mxu0 0.0
        %411 = vmatpush.msra.mxu0 0.0
        %412 = vmatpush.msra.mxu0 0.0
        %413 = vmatpush.msra.mxu0 0.0
        %414 = vmatpush.msra.mxu0 0.0
        %v415 = vand.u32 %v393, 4294901760
        %416 = vmatpush.msra.mxu0 %v415
        %v417 = vand.u32 %v395, 4294901760
        %v418 = vsub.f32 %v395, %v417
        %v419 = vand.u32 %v418, 4294901760
        %v420 = vsub.f32 %v418, %v419
        %v421 = vand.u32 %v420, 4294901760
        %422 = vmatmul.f32.gmra.mxu0 %v421
        %v423 = vpop.f32.mrf.mxu0
        %v424 = vadd.f32 0.0, %v423
        %v425 = vand.u32 %v398, 4294901760
        %v426 = vsub.f32 %v398, %v425
        %v427 = vand.u32 %v426, 4294901760
        %v428 = vsub.f32 %v426, %v427
        %v429 = vand.u32 %v428, 4294901760
        %430 = vmatmul.f32.gmra.mxu0 %v429
        %v431 = vpop.f32.mrf.mxu0
        %v432 = vadd.f32 0.0, %v431
        %433 = vdwg.mxu0
        %434 = vmatpush.msra.mxu0 0.0
        %435 = vmatpush.msra.mxu0 0.0
        %436 = vmatpush.msra.mxu0 0.0
        %437 = vmatpush.msra.mxu0 0.0
        %438 = vmatpush.msra.mxu0 0.0
        %439 = vmatpush.msra.mxu0 0.0
        %440 = vmatpush.msra.mxu0 0.0
        %441 = vmatpush.msra.mxu0 0.0
        %442 = vmatpush.msra.mxu0 0.0
        %443 = vmatpush.msra.mxu0 0.0
        %444 = vmatpush.msra.mxu0 0.0
        %445 = vmatpush.msra.mxu0 0.0
        %446 = vmatpush.msra.mxu0 0.0
        %447 = vmatpush.msra.mxu0 0.0
        %448 = vmatpush.msra.mxu0 0.0
        %v449 = vand.u32 %v393, 4294901760
        %v450 = vsub.f32 %v393, %v449
        %v451 = vand.u32 %v450, 4294901760
        %v452 = vsub.f32 %v450, %v451
        %v453 = vand.u32 %v452, 4294901760
        %454 = vmatpush.msra.mxu0 %v453
        %v455 = vand.u32 %v395, 4294901760
        %456 = vmatmul.f32.gmra.mxu0 %v455
        %v457 = vpop.f32.mrf.mxu0
        %v458 = vadd.f32 %v424, %v457
        %v459 = vand.u32 %v398, 4294901760
        %460 = vmatmul.f32.gmra.mxu0 %v459
        %v461 = vpop.f32.mrf.mxu0
        %v462 = vadd.f32 %v432, %v461
        %463 = vdwg.mxu0
        %464 = vmatpush.msra.mxu0 0.0
        %465 = vmatpush.msra.mxu0 0.0
        %466 = vmatpush.msra.mxu0 0.0
        %467 = vmatpush.msra.mxu0 0.0
        %468 = vmatpush.msra.mxu0 0.0
        %469 = vmatpush.msra.mxu0 0.0
        %470 = vmatpush.msra.mxu0 0.0
        %471 = vmatpush.msra.mxu0 0.0
        %472 = vmatpush.msra.mxu0 0.0
        %473 = vmatpush.msra.mxu0 0.0
        %474 = vmatpush.msra.mxu0 0.0
        %475 = vmatpush.msra.mxu0 0.0
        %476 = vmatpush.msra.mxu0 0.0
        %477 = vmatpush.msra.mxu0 0.0
        %478 = vmatpush.msra.mxu0 0.0
        %v479 = vand.u32 %v393, 4294901760
        %v480 = vsub.f32 %v393, %v479
        %481 = vmatpush.msra.mxu0 %v480
        %v482 = vand.u32 %v395, 4294901760
        %v483 = vsub.f32 %v395, %v482
        %484 = vmatmul.f32.gmra.mxu0 %v483
        %v485 = vpop.f32.mrf.mxu0
        %v486 = vadd.f32 %v458, %v485
        %v487 = vand.u32 %v398, 4294901760
        %v488 = vsub.f32 %v398, %v487
        %489 = vmatmul.f32.gmra.mxu0 %v488
        %v490 = vpop.f32.mrf.mxu0
        %v491 = vadd.f32 %v462, %v490
        %492 = vdwg.mxu0
        %493 = vmatpush.msra.mxu0 0.0
        %494 = vmatpush.msra.mxu0 0.0
        %495 = vmatpush.msra.mxu0 0.0
        %496 = vmatpush.msra.mxu0 0.0
        %497 = vmatpush.msra.mxu0 0.0
        %498 = vmatpush.msra.mxu0 0.0
        %499 = vmatpush.msra.mxu0 0.0
        %500 = vmatpush.msra.mxu0 0.0
        %501 = vmatpush.msra.mxu0 0.0
        %502 = vmatpush.msra.mxu0 0.0
        %503 = vmatpush.msra.mxu0 0.0
        %504 = vmatpush.msra.mxu0 0.0
        %505 = vmatpush.msra.mxu0 0.0
        %506 = vmatpush.msra.mxu0 0.0
        %507 = vmatpush.msra.mxu0 0.0
        %v508 = vand.u32 %v393, 4294901760
        %509 = vmatpush.msra.mxu0 %v508
        %v510 = vand.u32 %v395, 4294901760
        %v511 = vsub.f32 %v395, %v510
        %v512 = vand.u32 %v511, 4294901760
        %513 = vmatmul.f32.gmra.mxu0 %v512
        %v514 = vpop.f32.mrf.mxu0
        %v515 = vadd.f32 %v486, %v514
        %v516 = vand.u32 %v398, 4294901760
        %v517 = vsub.f32 %v398, %v516
        %v518 = vand.u32 %v517, 4294901760
        %519 = vmatmul.f32.gmra.mxu0 %v518
        %v520 = vpop.f32.mrf.mxu0
        %v521 = vadd.f32 %v491, %v520
        %522 = vdwg.mxu0
        %523 = vmatpush.msra.mxu0 0.0
        %524 = vmatpush.msra.mxu0 0.0
        %525 = vmatpush.msra.mxu0 0.0
        %526 = vmatpush.msra.mxu0 0.0
        %527 = vmatpush.msra.mxu0 0.0
        %528 = vmatpush.msra.mxu0 0.0
        %529 = vmatpush.msra.mxu0 0.0
        %530 = vmatpush.msra.mxu0 0.0
        %531 = vmatpush.msra.mxu0 0.0
        %532 = vmatpush.msra.mxu0 0.0
        %533 = vmatpush.msra.mxu0 0.0
        %534 = vmatpush.msra.mxu0 0.0
        %535 = vmatpush.msra.mxu0 0.0
        %536 = vmatpush.msra.mxu0 0.0
        %537 = vmatpush.msra.mxu0 0.0
        %v538 = vand.u32 %v393, 4294901760
        %v539 = vsub.f32 %v393, %v538
        %v540 = vand.u32 %v539, 4294901760
        %541 = vmatpush.msra.mxu0 %v540
        %v542 = vand.u32 %v395, 4294901760
        %543 = vmatmul.f32.gmra.mxu0 %v542
        %v544 = vpop.f32.mrf.mxu0
        %v545 = vadd.f32 %v515, %v544
        %v546 = vand.u32 %v398, 4294901760
        %547 = vmatmul.f32.gmra.mxu0 %v546
        %v548 = vpop.f32.mrf.mxu0
        %v549 = vadd.f32 %v521, %v548
        %550 = vdwg.mxu0
        %551 = vmatpush.msra.mxu0 0.0
        %552 = vmatpush.msra.mxu0 0.0
        %553 = vmatpush.msra.mxu0 0.0
        %554 = vmatpush.msra.mxu0 0.0
        %555 = vmatpush.msra.mxu0 0.0
        %556 = vmatpush.msra.mxu0 0.0
        %557 = vmatpush.msra.mxu0 0.0
        %558 = vmatpush.msra.mxu0 0.0
        %559 = vmatpush.msra.mxu0 0.0
        %560 = vmatpush.msra.mxu0 0.0
        %561 = vmatpush.msra.mxu0 0.0
        %562 = vmatpush.msra.mxu0 0.0
        %563 = vmatpush.msra.mxu0 0.0
        %564 = vmatpush.msra.mxu0 0.0
        %565 = vmatpush.msra.mxu0 0.0
        %v566 = vand.u32 %v393, 4294901760
        %567 = vmatpush.msra.mxu0 %v566
        %v568 = vand.u32 %v395, 4294901760
        %569 = vmatmul.f32.gmra.mxu0 %v568
        %v570 = vpop.f32.mrf.mxu0
        %v571 = vadd.f32 %v545, %v570
        %v572 = vand.u32 %v398, 4294901760
        %573 = vmatmul.f32.gmra.mxu0 %v572
        %v574 = vpop.f32.mrf.mxu0
        %v575 = vadd.f32 %v549, %v574
        %576 = vdwg.mxu0
        %vm577 = vcmask 130048
        %578 = vst.msk [vmem:[%s205] sm:$0xff] %vm577, %v571
        %579 = vst.msk [vmem:[%s205 + $0x8] sm:$0xff] %vm577, %v575
        %s580 = sand.u32 %s112, 1
        %s581 = scalar_lea.sflag [#allocation4], %s580
        %s582 = sand.u32 %s112, 1
        %s583 = smul.addr %s582, 16
        %s584 = scalar_lea.vmem [#allocation5], %s583
        // Predicated region
        $region37: #{tpu_custom_call.1} parent=31 // pred_check
          %p585 = pneg %p122
        $region38: #{tpu_custom_call.1} parent=31 // pred_check_branch
          %587 = sbr.rel (%p585) target = $region40
        $region39: #{tpu_custom_call.1} parent=31 // pred_region
          %589 = vsyncadd %s581, 0
          %s590 = smul.addr %s25, 2
          %s591 = smul.addr %s24, 8
          %s592 = sadd.s32 %s590, %s591
          %s593 = smul.addr %s592, 8
          %s594 = scalar_lea.hbm %s3, %s593
          %s595 = sshll.u32 %s584, 4
          %s596 = int_to_ptr.vmem [resolvable:$true] %s595
          %s597 = sshll.u32 %s594, 4
          %s598 = int_to_ptr.hbm [resolvable:$true] %s597
          %603 = dma.vmem_to_hbm [thread:$0]  %s596, 256, %s598, %s581, 128, 128, 8
        $region40: #{tpu_custom_call.1} parent=31 // pred_fallthru
          _
      $region32: #{tpu_custom_call.1} parent=5 // pred_fallthru
        _
      %p604 = scmp.le.s32.totalorder 2, %s15
      // Predicated region
      $region41: #{tpu_custom_call.1} parent=5 // pred_check
        %p605 = pneg %p604
      $region42: #{tpu_custom_call.1} parent=5 // pred_check_branch
        %607 = sbr.rel (%p605) target = $region44
      $region43: #{tpu_custom_call.1} parent=5 // pred_region
        %s608 = ssub.s32 %s15, 2
        // Predicated region
        $region45: #{tpu_custom_call.1} parent=43 // pred_check
          %p609 = pneg %p128
        $region46: #{tpu_custom_call.1} parent=43 // pred_check_branch
          %611 = sbr.rel (%p609) target = $region48
        $region47: #{tpu_custom_call.1} parent=43 // pred_region
          %s612 = sand.u32 %s113, 1
          %s613 = scalar_lea.sflag [#allocation4], %s612
          %s614 = sand.u32 %s113, 1
          %s615 = smul.addr %s614, 16
          %s616 = scalar_lea.vmem [#allocation5], %s615
          %618 = dma.done %s613, 256
        $region48: #{tpu_custom_call.1} parent=43 // pred_fallthru
          _
      $region44: #{tpu_custom_call.1} parent=5 // pred_fallthru
        _
    $region6: #{tpu_custom_call.1} parent=1 // loop_footer
      %s19 = sadd.s32 1, %s15
    $region7: #{tpu_custom_call.1} parent=1 // loop_footer_branch
      %14 = sbr.rel target = $region3
    $region8: #{tpu_custom_call.1} parent=1 // loop_exit
      _
    %619 = vsyncpa [#allocation3], 1
    %s620 = scalar_lea.sflag [#allocation3], 1
    %621 = vsyncpa %s620, 1
    %622 = vsyncpa [#allocation4], 1
    %s623 = scalar_lea.sflag [#allocation4], 1
    %624 = vsyncpa %s623, 1

</llo_original>
